<compile_context>
chip_gen: v7x
topology: tpu7x:2x2x1
jax: 0.10.0
libtpu: 0.0.40
codegen_flags: <defaults>
</compile_context>

<pallas_src>
import functools

import jax
import jax.numpy as jnp
from jax import lax
from jax.experimental import pallas as pl
from jax.experimental.pallas import tpu as pltpu


def _round_up(x, m):
    return (x + m - 1) // m * m


def _critic_kernel(x_ref, w12t_ref, b12_ref, w2at_ref, b2_ref, w3_ref, b3_ref,
                   out_ref, *, hidden):
    # Fused fc1 + (action @ W2b) in one MXU call, computed transposed:
    #   zT = W12^T @ x_tile^T   -> (2*hidden, tile_b)
    zt = lax.dot_general(
        w12t_ref[...], x_ref[...],
        dimension_numbers=(((1,), (1,)), ((), ())),
        preferred_element_type=jnp.float32,
    ) + b12_ref[...]                                   # bias column broadcast

    h1t = jnp.maximum(zt[:hidden, :], 0.0)             # relu(state@W1 + b1)^T
    awt = zt[hidden:, :]                               # (action @ W2b)^T

    # fc2: h2^T = relu(W2a^T @ h1^T + (a@W2b)^T + b2)
    h2t = jnp.dot(w2at_ref[...], h1t.astype(w2at_ref.dtype),
                  preferred_element_type=jnp.float32) + awt + b2_ref[...]
    h2t = jnp.maximum(h2t, 0.0)

    # fc3 as VPU multiply + sublane reduction (no N=1 matmul); result is a
    # lane-dense (1, tile_b) row, stored with full-lane (unmasked) stores.
    q = jnp.sum(h2t * w3_ref[...], axis=0, keepdims=True) + b3_ref[...]
    out_ref[...] = q.astype(out_ref.dtype)


def critic_forward(state, action, params, *, block_b=512,
                   compute_dtype=jnp.float32):
    """state: (B, state_dim), action: (B, act_dim) -> (B, 1) float32."""
    w1, b1, w2, b2, w3, b3 = (params[k] for k in
                              ("w1", "b1", "w2", "b2", "w3", "b3"))
    B = state.shape[0]
    state_dim = w1.shape[0]
    hidden = w1.shape[1]
    act_dim = w2.shape[0] - hidden
    in_dim = state_dim + act_dim
    two_h = 2 * hidden

    # Fused input [state | action]; the torch.cat for fc2 is realized via the
    # block-diagonal weight below.
    x = jnp.concatenate([state, action], axis=1).astype(jnp.float32)

    # Batch tiling: tile must be a multiple of 128 so the (1, tile_b) output
    # block is lane-dense; pad B up to a whole number of tiles.
    tile_b = min(block_b, _round_up(B, 128))
    tile_b = max(128, (tile_b // 128) * 128)
    b_pad = _round_up(B, tile_b)
    if b_pad != B:
        x = jnp.pad(x, ((0, b_pad - B), (0, 0)))
    num_tiles = b_pad // tile_b

    # Block-diagonal fused first-layer weight, stored transposed for the
    # feature-major in-kernel compute:  W12^T = [[W1^T, 0], [0, W2b^T]].
    w2a = w2[:hidden, :]
    w2b = w2[hidden:, :]
    w12t = jnp.zeros((two_h, in_dim), jnp.float32)
    w12t = w12t.at[:hidden, :state_dim].set(w1.T)
    w12t = w12t.at[hidden:, state_dim:].set(w2b.T)
    w2at = jnp.asarray(w2a.T, jnp.float32)              # (hidden, hidden)

    # Biases as columns (broadcast along the lane/batch axis inside the kernel).
    b12c = jnp.concatenate(
        [b1, jnp.zeros((hidden,), jnp.float32)]).reshape(two_h, 1)
    b2c = b2.reshape(hidden, 1).astype(jnp.float32)
    w3c = w3.reshape(hidden, 1).astype(jnp.float32)
    b3c = b3.reshape(1, 1).astype(jnp.float32)

    # Optional bf16 matmul operands for v6e/v7x MXUs; accumulation stays f32.
    if compute_dtype != jnp.float32:
        x = x.astype(compute_dtype)
        w12t = w12t.astype(compute_dtype)
        w2at = w2at.astype(compute_dtype)

    kernel = functools.partial(_critic_kernel, hidden=hidden)

    q_row = pl.pallas_call(
        kernel,
        out_shape=jax.ShapeDtypeStruct((1, b_pad), jnp.float32),
        grid=(num_tiles,),
        in_specs=[
            # Streamed per-tile activation block (auto double-buffered).
            pl.BlockSpec((tile_b, in_dim), lambda i: (i, 0)),
            # Weights / biases: constant index maps -> resident in VMEM.
            pl.BlockSpec((two_h, in_dim), lambda i: (0, 0)),
            pl.BlockSpec((two_h, 1), lambda i: (0, 0)),
            pl.BlockSpec((hidden, hidden), lambda i: (0, 0)),
            pl.BlockSpec((hidden, 1), lambda i: (0, 0)),
            pl.BlockSpec((hidden, 1), lambda i: (0, 0)),
            pl.BlockSpec((1, 1), lambda i: (0, 0)),
        ],
        out_specs=pl.BlockSpec((1, tile_b), lambda i: (0, i)),
        compiler_params=pltpu.CompilerParams(
            dimension_semantics=("parallel",)),
    )(x, w12t, b12c, w2at, b2c, w3c, b3c)

    return q_row[0, :B].reshape(B, 1)


def init_critic_params(key, state_dim, act_dim, hidden=64):
    """Synthetic init matching the module: weights ~ N(0, 0.2); biases use
    PyTorch's default U(-1/sqrt(fan_in), 1/sqrt(fan_in)).  Weights stored as
    (in_features, out_features) = W.T of the torch layout."""
    k1, k2, k3, kb1, kb2, kb3 = jax.random.split(key, 6)

    def bias(k, fan_in, n):
        bound = 1.0 / jnp.sqrt(fan_in)
        return jax.random.uniform(k, (n,), jnp.float32, -bound, bound)

    w1 = 0.2 * jax.random.normal(k1, (state_dim, hidden), jnp.float32)
    w2 = 0.2 * jax.random.normal(k2, (hidden + act_dim, hidden), jnp.float32)
    w3 = 0.2 * jax.random.normal(k3, (hidden, 1), jnp.float32)
    return {
        "w1": w1, "b1": bias(kb1, state_dim, hidden),
        "w2": w2, "b2": bias(kb2, hidden + act_dim, hidden),
        "w3": w3, "b3": bias(kb3, hidden, 1),
    }


def critic_ref(state, action, params):
    """Pure-JAX reference for correctness checking."""
    hp = jax.lax.Precision.HIGHEST
    h1 = jax.nn.relu(jnp.dot(state, params["w1"], precision=hp) + params["b1"])
    cat = jnp.concatenate([h1, action], axis=1)
    h2 = jax.nn.relu(jnp.dot(cat, params["w2"], precision=hp) + params["b2"])
    return jnp.dot(h2, params["w3"], precision=hp) + params["b3"]


if __name__ == "__main__":
    key = jax.random.PRNGKey(0)
    kp, ks, ka = jax.random.split(key, 3)

    batch, state_dim, act_dim = 8, 16, 4
    params = init_critic_params(kp, state_dim, act_dim)
    state = jax.random.normal(ks, (batch, state_dim), jnp.float32)
    action = jax.random.normal(ka, (batch, act_dim), jnp.float32)

    out = critic_forward(state, action, params)
    out = jax.block_until_ready(out)

    ref = critic_ref(state, action, params)
    assert out.shape == (batch, 1)
    assert jnp.allclose(out, ref, atol=1e-4, rtol=1e-4), "mismatch vs reference"
    print("KERNEL_OK")
</pallas_src>

<mosaic_0001>
module attributes {stable_mosaic.version = 11 : i64} {
  func.func @_critic_kernel(%arg0: i32, %arg1: memref<128x20xf32, #tpu.memory_space<vmem>>, %arg2: memref<128x20xf32, #tpu.memory_space<vmem>>, %arg3: memref<128x1xf32, #tpu.memory_space<vmem>>, %arg4: memref<64x64xf32, #tpu.memory_space<vmem>>, %arg5: memref<64x1xf32, #tpu.memory_space<vmem>>, %arg6: memref<64x1xf32, #tpu.memory_space<vmem>>, %arg7: memref<1x1xf32, #tpu.memory_space<vmem>>, %arg8: memref<1x128xf32, #tpu.memory_space<vmem>>) attributes {dimension_semantics = [#tpu.dimension_semantics<parallel>], iteration_bounds = array<i64: 1>, scalar_prefetch = 0 : i64, scratch_operands = 0 : i64, tpu.core_type = #tpu.core_type<tc>, window_params = [{transform_indices = @transform_0, window_bounds = array<i64: 128, 20>}, {pipeline_mode = #tpu.pipeline_mode<synchronous>, transform_indices = @transform_1, window_bounds = array<i64: 128, 20>}, {pipeline_mode = #tpu.pipeline_mode<synchronous>, transform_indices = @transform_2, window_bounds = array<i64: 128, 1>}, {pipeline_mode = #tpu.pipeline_mode<synchronous>, transform_indices = @transform_3, window_bounds = array<i64: 64, 64>}, {pipeline_mode = #tpu.pipeline_mode<synchronous>, transform_indices = @transform_4, window_bounds = array<i64: 64, 1>}, {pipeline_mode = #tpu.pipeline_mode<synchronous>, transform_indices = @transform_5, window_bounds = array<i64: 64, 1>}, {pipeline_mode = #tpu.pipeline_mode<synchronous>, transform_indices = @transform_6, window_bounds = array<i64: 1, 1>}, {transform_indices = @transform_7, window_bounds = array<i64: 1, 128>}]} {
    %c0 = arith.constant 0 : index
    %c0_0 = arith.constant 0 : index
    %0 = vector.load %arg2[%c0, %c0_0] : memref<128x20xf32, #tpu.memory_space<vmem>>, vector<128x20xf32>
    %c0_1 = arith.constant 0 : index
    %c0_2 = arith.constant 0 : index
    %1 = vector.load %arg1[%c0_1, %c0_2] : memref<128x20xf32, #tpu.memory_space<vmem>>, vector<128x20xf32>
    %cst = arith.constant dense<0.000000e+00> : vector<128x128xf32>
    %2 = tpu.matmul %0, %1, %cst {dimension_numbers = #tpu.dot_dimension_numbers<[1], [1], [0], [0], [0, 0, 1, 0], [], []>} : vector<128x20xf32>, vector<128x20xf32>, vector<128x128xf32> -> vector<128x128xf32>
    %c0_3 = arith.constant 0 : index
    %c0_4 = arith.constant 0 : index
    %3 = vector.load %arg3[%c0_3, %c0_4] : memref<128x1xf32, #tpu.memory_space<vmem>>, vector<128x1xf32>
    %4 = vector.broadcast %3 : vector<128x1xf32> to vector<128x128xf32>
    %5 = arith.addf %2, %4 : vector<128x128xf32>
    %6 = vector.extract_strided_slice %5 {offsets = [0, 0], sizes = [64, 128], strides = [1, 1]} : vector<128x128xf32> to vector<64x128xf32>
    %cst_5 = arith.constant 0.000000e+00 : f32
    %7 = vector.broadcast %cst_5 : f32 to vector<64x128xf32>
    %8 = arith.maximumf %6, %7 : vector<64x128xf32>
    %9 = vector.extract_strided_slice %5 {offsets = [64, 0], sizes = [64, 128], strides = [1, 1]} : vector<128x128xf32> to vector<64x128xf32>
    %c0_6 = arith.constant 0 : index
    %c0_7 = arith.constant 0 : index
    %10 = vector.load %arg4[%c0_6, %c0_7] : memref<64x64xf32, #tpu.memory_space<vmem>>, vector<64x64xf32>
    %cst_8 = arith.constant dense<0.000000e+00> : vector<64x128xf32>
    %11 = tpu.matmul %10, %8, %cst_8 {dimension_numbers = #tpu.dot_dimension_numbers<[1], [0], [0], [1], [0, 0, 1, 1], [], []>} : vector<64x64xf32>, vector<64x128xf32>, vector<64x128xf32> -> vector<64x128xf32>
    %12 = arith.addf %11, %9 : vector<64x128xf32>
    %c0_9 = arith.constant 0 : index
    %c0_10 = arith.constant 0 : index
    %13 = vector.load %arg5[%c0_9, %c0_10] : memref<64x1xf32, #tpu.memory_space<vmem>>, vector<64x1xf32>
    %14 = vector.broadcast %13 : vector<64x1xf32> to vector<64x128xf32>
    %15 = arith.addf %12, %14 : vector<64x128xf32>
    %cst_11 = arith.constant 0.000000e+00 : f32
    %16 = vector.broadcast %cst_11 : f32 to vector<64x128xf32>
    %17 = arith.maximumf %15, %16 : vector<64x128xf32>
    %c0_12 = arith.constant 0 : index
    %c0_13 = arith.constant 0 : index
    %18 = vector.load %arg6[%c0_12, %c0_13] : memref<64x1xf32, #tpu.memory_space<vmem>>, vector<64x1xf32>
    %19 = vector.broadcast %18 : vector<64x1xf32> to vector<64x128xf32>
    %20 = arith.mulf %17, %19 : vector<64x128xf32>
    %cst_14 = arith.constant dense<0.000000e+00> : vector<128xf32>
    %21 = vector.multi_reduction <add>, %20, %cst_14 [0] : vector<64x128xf32> to vector<128xf32>
    %22 = vector.shape_cast %21 : vector<128xf32> to vector<1x128xf32>
    %c0_15 = arith.constant 0 : index
    %c0_16 = arith.constant 0 : index
    %23 = vector.load %arg7[%c0_15, %c0_16] : memref<1x1xf32, #tpu.memory_space<vmem>>, vector<1x1xf32>
    %24 = vector.broadcast %23 : vector<1x1xf32> to vector<1x128xf32>
    %25 = arith.addf %22, %24 : vector<1x128xf32>
    %c0_17 = arith.constant 0 : index
    %c0_18 = arith.constant 0 : index
    %26 = vector.load %arg8[%c0_17, %c0_18] : memref<1x128xf32, #tpu.memory_space<vmem>>, vector<1x128xf32>
    tpu.vector_store %arg8[%c0_17, %c0_18], %25 {strides = array<i32>} : memref<1x128xf32, #tpu.memory_space<vmem>>, vector<1x128xf32>,
    return
  }
  func.func @transform_0(%arg0: i32) -> (i32, i32) {
    %c0_i32 = arith.constant 0 : i32
    %c0_i32_0 = arith.constant 0 : i32
    return %arg0, %c0_i32 : i32, i32
  }
  func.func @transform_1(%arg0: i32) -> (i32, i32) {
    %c0_i32 = arith.constant 0 : i32
    %c0_i32_0 = arith.constant 0 : i32
    %c0_i32_1 = arith.constant 0 : i32
    return %c0_i32, %c0_i32_0 : i32, i32
  }
  func.func @transform_2(%arg0: i32) -> (i32, i32) {
    %c0_i32 = arith.constant 0 : i32
    %c0_i32_0 = arith.constant 0 : i32
    %c0_i32_1 = arith.constant 0 : i32
    return %c0_i32, %c0_i32_0 : i32, i32
  }
  func.func @transform_3(%arg0: i32) -> (i32, i32) {
    %c0_i32 = arith.constant 0 : i32
    %c0_i32_0 = arith.constant 0 : i32
    %c0_i32_1 = arith.constant 0 : i32
    return %c0_i32, %c0_i32_0 : i32, i32
  }
  func.func @transform_4(%arg0: i32) -> (i32, i32) {
    %c0_i32 = arith.constant 0 : i32
    %c0_i32_0 = arith.constant 0 : i32
    %c0_i32_1 = arith.constant 0 : i32
    return %c0_i32, %c0_i32_0 : i32, i32
  }
  func.func @transform_5(%arg0: i32) -> (i32, i32) {
    %c0_i32 = arith.constant 0 : i32
    %c0_i32_0 = arith.constant 0 : i32
    %c0_i32_1 = arith.constant 0 : i32
    return %c0_i32, %c0_i32_0 : i32, i32
  }
  func.func @transform_6(%arg0: i32) -> (i32, i32) {
    %c0_i32 = arith.constant 0 : i32
    %c0_i32_0 = arith.constant 0 : i32
    %c0_i32_1 = arith.constant 0 : i32
    return %c0_i32, %c0_i32_0 : i32, i32
  }
  func.func @transform_7(%arg0: i32) -> (i32, i32) {
    %c0_i32 = arith.constant 0 : i32
    %c0_i32_0 = arith.constant 0 : i32
    return %c0_i32, %arg0 : i32, i32
  }
}

</mosaic_0001>

<llo_original>
// kernel: tpu_custom_call.1
$region0: #{tpu_custom_call.1}
  #allocation0 [shape = 'u32[]', space=smem, size = 0x4, offset = 0x4, fixed_abs, tag = 'smem constant byte address 0x4 - core index']
  #allocation1 [shape = 'u32[144,128]{1,0:T(1,128)}', space=vmem, size = 0x12000, scoped, tag = 'internal scratch']
  #allocation2 [shape = 'f32[1,1]{1,0:T(1,128)S(1)}', space=vmem, size = 0x200, scoped, tag = 'scoped memory for tpu_custom_call.1']
  %s0 = inlined_call_operand.vmem [shape: f32[128,20], index: 0, kind: input, shape index: {}]
  %s1 = inlined_call_operand.vmem [shape: f32[128,20], index: 1, kind: input, shape index: {}]
  %s2 = inlined_call_operand.vmem [shape: f32[128,1], index: 2, kind: input, shape index: {}]
  %s3 = inlined_call_operand.vmem [shape: f32[64,64], index: 3, kind: input, shape index: {}]
  %s4 = inlined_call_operand.vmem [shape: f32[64,1], index: 4, kind: input, shape index: {}]
  %s5 = inlined_call_operand.vmem [shape: f32[64,1], index: 5, kind: input, shape index: {}]
  %s6 = inlined_call_operand.<no memory space> [shape: f32[1,1], index: 6, kind: input, shape index: {}]
  %s7 = inlined_call_operand.hbm [shape: f32[1,128], index: 7, kind: output, shape index: {}]
  %s8 = sld [smem:[#allocation0]]
  $region38: #{tpu_custom_call.1} parent=0
    _
  %s10 = ssub.s32 1, %s8
  %s11 = scalar_select 0, %s10, %s8
  %v12 = vstv %s6
  %13 = vst [vmem:[#allocation2] sm:$0x1] %v12
  $region1: #{tpu_custom_call.1} parent=0
    #allocation3 [shape = 'u8[512]{0}', space=vmem, size = 0x400, scoped, tag = 'output window, operand 0, single buffered']
    #allocation4 [shape = 's32[1]{0}', space=sflag, size = 0x4, scoped, tag = 'scoped memory for tpu_custom_call.1']
    %14 = vsyncpa [#allocation4], 0
    // Predicated region
    $region2: #{tpu_custom_call.1} parent=1 // pred_check
      _
    $region3: #{tpu_custom_call.1} parent=1 // pred_check_branch
      %16 = sbr.rel (0) target = $region5
    $region4: #{tpu_custom_call.1} parent=1 // pred_region
      _
    $region5: #{tpu_custom_call.1} parent=1 // pred_fallthru
      _
    // Predicated region
    $region6: #{tpu_custom_call.1} parent=1 // pred_check
      _
    $region7: #{tpu_custom_call.1} parent=1 // pred_check_branch
      %18 = sbr.rel (0) target = $region9
    $region8: #{tpu_custom_call.1} parent=1 // pred_region
      _
    $region9: #{tpu_custom_call.1} parent=1 // pred_fallthru
      _
    // Predicated region
    $region10: #{tpu_custom_call.1} parent=1 // pred_check
      _
    $region11: #{tpu_custom_call.1} parent=1 // pred_check_branch
      %20 = sbr.rel (0) target = $region13
    $region12: #{tpu_custom_call.1} parent=1 // pred_region
      _
    $region13: #{tpu_custom_call.1} parent=1 // pred_fallthru
      _
    // Predicated region
    $region14: #{tpu_custom_call.1} parent=1 // pred_check
      _
    $region15: #{tpu_custom_call.1} parent=1 // pred_check_branch
      %22 = sbr.rel (0) target = $region17
    $region16: #{tpu_custom_call.1} parent=1 // pred_region
      _
    $region17: #{tpu_custom_call.1} parent=1 // pred_fallthru
      _
    // Predicated region
    $region18: #{tpu_custom_call.1} parent=1 // pred_check
      _
    $region19: #{tpu_custom_call.1} parent=1 // pred_check_branch
      %24 = sbr.rel (0) target = $region21
    $region20: #{tpu_custom_call.1} parent=1 // pred_region
      _
    $region21: #{tpu_custom_call.1} parent=1 // pred_fallthru
      _
    // Predicated region
    $region22: #{tpu_custom_call.1} parent=1 // pred_check
      _
    $region23: #{tpu_custom_call.1} parent=1 // pred_check_branch
      %26 = sbr.rel (0) target = $region25
    $region24: #{tpu_custom_call.1} parent=1 // pred_region
      _
    $region25: #{tpu_custom_call.1} parent=1 // pred_fallthru
      _
    // Predicated region
    $region26: #{tpu_custom_call.1} parent=1 // pred_check
      _
    $region27: #{tpu_custom_call.1} parent=1 // pred_check_branch
      %28 = sbr.rel (0) target = $region29
    $region28: #{tpu_custom_call.1} parent=1 // pred_region
      _
    $region29: #{tpu_custom_call.1} parent=1 // pred_fallthru
      _
    %v29 = vld [vmem:[%s1] sm:$0xff]
    %v30 = vld [vmem:[%s1 + $0x8] sm:$0xff]
    %v31 = vld [vmem:[%s1 + $0x10] sm:$0xff]
    %v32 = vld [vmem:[%s1 + $0x18] sm:$0xff]
    %v33 = vld [vmem:[%s1 + $0x20] sm:$0xff]
    %v34 = vld [vmem:[%s1 + $0x28] sm:$0xff]
    %v35 = vld [vmem:[%s1 + $0x30] sm:$0xff]
    %v36 = vld [vmem:[%s1 + $0x38] sm:$0xff]
    %v37 = vld [vmem:[%s1 + $0x40] sm:$0xff]
    %v38 = vld [vmem:[%s1 + $0x48] sm:$0xff]
    %v39 = vld [vmem:[%s1 + $0x50] sm:$0xff]
    %v40 = vld [vmem:[%s1 + $0x58] sm:$0xff]
    %v41 = vld [vmem:[%s1 + $0x60] sm:$0xff]
    %v42 = vld [vmem:[%s1 + $0x68] sm:$0xff]
    %v43 = vld [vmem:[%s1 + $0x70] sm:$0xff]
    %v44 = vld [vmem:[%s1 + $0x78] sm:$0xff]
    %v45 = vld [vmem:[%s0] sm:$0xff]
    %v46 = vld [vmem:[%s0 + $0x8] sm:$0xff]
    %v47 = vld [vmem:[%s0 + $0x10] sm:$0xff]
    %v48 = vld [vmem:[%s0 + $0x18] sm:$0xff]
    %v49 = vld [vmem:[%s0 + $0x20] sm:$0xff]
    %v50 = vld [vmem:[%s0 + $0x28] sm:$0xff]
    %v51 = vld [vmem:[%s0 + $0x30] sm:$0xff]
    %v52 = vld [vmem:[%s0 + $0x38] sm:$0xff]
    %v53 = vld [vmem:[%s0 + $0x40] sm:$0xff]
    %v54 = vld [vmem:[%s0 + $0x48] sm:$0xff]
    %v55 = vld [vmem:[%s0 + $0x50] sm:$0xff]
    %v56 = vld [vmem:[%s0 + $0x58] sm:$0xff]
    %v57 = vld [vmem:[%s0 + $0x60] sm:$0xff]
    %v58 = vld [vmem:[%s0 + $0x68] sm:$0xff]
    %v59 = vld [vmem:[%s0 + $0x70] sm:$0xff]
    %v60 = vld [vmem:[%s0 + $0x78] sm:$0xff]
    %v61 = vld [vmem:[%s2] sm:$0xff]
    %v62 = vld [vmem:[%s2 + $0x8] sm:$0xff]
    %v63 = vld [vmem:[%s2 + $0x10] sm:$0xff]
    %v64 = vld [vmem:[%s2 + $0x18] sm:$0xff]
    %v65 = vld [vmem:[%s2 + $0x20] sm:$0xff]
    %v66 = vld [vmem:[%s2 + $0x28] sm:$0xff]
    %v67 = vld [vmem:[%s2 + $0x30] sm:$0xff]
    %v68 = vld [vmem:[%s2 + $0x38] sm:$0xff]
    %v69 = vld [vmem:[%s2 + $0x40] sm:$0xff]
    %v70 = vld [vmem:[%s2 + $0x48] sm:$0xff]
    %v71 = vld [vmem:[%s2 + $0x50] sm:$0xff]
    %v72 = vld [vmem:[%s2 + $0x58] sm:$0xff]
    %v73 = vld [vmem:[%s2 + $0x60] sm:$0xff]
    %v74 = vld [vmem:[%s2 + $0x68] sm:$0xff]
    %v75 = vld [vmem:[%s2 + $0x70] sm:$0xff]
    %v76 = vld [vmem:[%s2 + $0x78] sm:$0xff]
    %78 = vset.pattern.permute.xlu0 0
    %79 = vperm.xlu0 %78, %v61
    %v80 = vpop.permute.xlu0 %79
    %83 = vset.pattern.permute.xlu0 0
    %84 = vperm.xlu0 %83, %v62
    %v85 = vpop.permute.xlu0 %84
    %88 = vset.pattern.permute.xlu0 0
    %89 = vperm.xlu0 %88, %v63
    %v90 = vpop.permute.xlu0 %89
    %93 = vset.pattern.permute.xlu0 0
    %94 = vperm.xlu0 %93, %v64
    %v95 = vpop.permute.xlu0 %94
    %98 = vset.pattern.permute.xlu0 0
    %99 = vperm.xlu0 %98, %v65
    %v100 = vpop.permute.xlu0 %99
    %103 = vset.pattern.permute.xlu0 0
    %104 = vperm.xlu0 %103, %v66
    %v105 = vpop.permute.xlu0 %104
    %108 = vset.pattern.permute.xlu0 0
    %109 = vperm.xlu0 %108, %v67
    %v110 = vpop.permute.xlu0 %109
    %113 = vset.pattern.permute.xlu0 0
    %114 = vperm.xlu0 %113, %v68
    %v115 = vpop.permute.xlu0 %114
    %118 = vset.pattern.permute.xlu0 0
    %119 = vperm.xlu0 %118, %v69
    %v120 = vpop.permute.xlu0 %119
    %123 = vset.pattern.permute.xlu0 0
    %124 = vperm.xlu0 %123, %v70
    %v125 = vpop.permute.xlu0 %124
    %128 = vset.pattern.permute.xlu0 0
    %129 = vperm.xlu0 %128, %v71
    %v130 = vpop.permute.xlu0 %129
    %133 = vset.pattern.permute.xlu0 0
    %134 = vperm.xlu0 %133, %v72
    %v135 = vpop.permute.xlu0 %134
    %138 = vset.pattern.permute.xlu0 0
    %139 = vperm.xlu0 %138, %v73
    %v140 = vpop.permute.xlu0 %139
    %143 = vset.pattern.permute.xlu0 0
    %144 = vperm.xlu0 %143, %v74
    %v145 = vpop.permute.xlu0 %144
    %148 = vset.pattern.permute.xlu0 0
    %149 = vperm.xlu0 %148, %v75
    %v150 = vpop.permute.xlu0 %149
    %153 = vset.pattern.permute.xlu0 0
    %154 = vperm.xlu0 %153, %v76
    %v155 = vpop.permute.xlu0 %154
    %vm157 = vcmask 162816
    %v159 = vsel %vm157, %v29, 0
    %v162 = vsel %vm157, %v30, 0
    %v165 = vsel %vm157, %v31, 0
    %v168 = vsel %vm157, %v32, 0
    %v171 = vsel %vm157, %v33, 0
    %v174 = vsel %vm157, %v34, 0
    %v177 = vsel %vm157, %v35, 0
    %v180 = vsel %vm157, %v36, 0
    %v183 = vsel %vm157, %v37, 0
    %v186 = vsel %vm157, %v38, 0
    %v189 = vsel %vm157, %v39, 0
    %v192 = vsel %vm157, %v40, 0
    %v195 = vsel %vm157, %v41, 0
    %v198 = vsel %vm157, %v42, 0
    %v201 = vsel %vm157, %v43, 0
    %v204 = vsel %vm157, %v44, 0
    %v207 = vsel %vm157, %v45, 0
    %v210 = vsel %vm157, %v46, 0
    %v213 = vsel %vm157, %v47, 0
    %v216 = vsel %vm157, %v48, 0
    %v219 = vsel %vm157, %v49, 0
    %v222 = vsel %vm157, %v50, 0
    %v225 = vsel %vm157, %v51, 0
    %v228 = vsel %vm157, %v52, 0
    %v231 = vsel %vm157, %v53, 0
    %v234 = vsel %vm157, %v54, 0
    %v237 = vsel %vm157, %v55, 0
    %v240 = vsel %vm157, %v56, 0
    %v243 = vsel %vm157, %v57, 0
    %v246 = vsel %vm157, %v58, 0
    %v249 = vsel %vm157, %v59, 0
    %v252 = vsel %vm157, %v60, 0
    %254 = vmatprep.subr.mxu0 0.0
    %255 = vmatpush1.xpose.msra.mxu0 %v207
    %256 = vmatprep.subr.mxu0 0.0
    %257 = vmatpush1.xpose.msra.mxu0 %v210
    %258 = vmatprep.subr.mxu0 0.0
    %259 = vmatpush1.xpose.msra.mxu0 %v213
    %260 = vmatprep.subr.mxu0 0.0
    %261 = vmatpush1.xpose.msra.mxu0 %v216
    %262 = vmatprep.subr.mxu0 0.0
    %263 = vmatpush1.xpose.msra.mxu0 %v219
    %264 = vmatprep.subr.mxu0 0.0
    %265 = vmatpush1.xpose.msra.mxu0 %v222
    %266 = vmatprep.subr.mxu0 0.0
    %267 = vmatpush1.xpose.msra.mxu0 %v225
    %268 = vmatprep.subr.mxu0 0.0
    %269 = vmatpush1.xpose.msra.mxu0 %v228
    %270 = vmatprep.subr.mxu0 0.0
    %271 = vmatpush1.xpose.msra.mxu0 %v231
    %272 = vmatprep.subr.mxu0 0.0
    %273 = vmatpush1.xpose.msra.mxu0 %v234
    %274 = vmatprep.subr.mxu0 0.0
    %275 = vmatpush1.xpose.msra.mxu0 %v237
    %276 = vmatprep.subr.mxu0 0.0
    %277 = vmatpush1.xpose.msra.mxu0 %v240
    %278 = vmatprep.subr.mxu0 0.0
    %279 = vmatpush1.xpose.msra.mxu0 %v243
    %280 = vmatprep.subr.mxu0 0.0
    %281 = vmatpush1.xpose.msra.mxu0 %v246
    %282 = vmatprep.subr.mxu0 0.0
    %283 = vmatpush1.xpose.msra.mxu0 %v249
    %284 = vmatprep.subr.mxu0 0.0
    %285 = vmatpush1.xpose.msra.mxu0 %v252
    %286 = vmatprep.subr.mxu0 0.0
    %287 = vmatpush1.xpose.msra.mxu0 0.0
    %288 = vmatprep.subr.mxu0 0.0
    %289 = vmatpush1.xpose.msra.mxu0 0.0
    %290 = vmatprep.subr.mxu0 0.0
    %291 = vmatpush1.xpose.msra.mxu0 0.0
    %292 = vmatprep.subr.mxu0 0.0
    %293 = vmatpush1.xpose.msra.mxu0 0.0
    %294 = vmatprep.subr.mxu0 0.0
    %295 = vmatpush1.xpose.msra.mxu0 0.0
    %296 = vmatprep.subr.mxu0 0.0
    %297 = vmatpush1.xpose.msra.mxu0 0.0
    %298 = vmatprep.subr.mxu0 0.0
    %299 = vmatpush1.xpose.msra.mxu0 0.0
    %300 = vmatprep.subr.mxu0 0.0
    %301 = vmatpush1.xpose.msra.mxu0 0.0
    %302 = vmatprep.subr.mxu0 0.0
    %303 = vmatpush1.xpose.msra.mxu0 0.0
    %304 = vmatprep.subr.mxu0 0.0
    %305 = vmatpush1.xpose.msra.mxu0 0.0
    %306 = vmatprep.subr.mxu0 0.0
    %307 = vmatpush1.xpose.msra.mxu0 0.0
    %308 = vmatprep.subr.mxu0 0.0
    %309 = vmatpush1.xpose.msra.mxu0 0.0
    %310 = vmatprep.subr.mxu0 0.0
    %311 = vmatpush1.xpose.msra.mxu0 0.0
    %312 = vmatprep.subr.mxu0 0.0
    %313 = vmatpush1.xpose.msra.mxu0 0.0
    %314 = vmatprep.subr.mxu0 0.0
    %315 = vmatpush1.xpose.msra.mxu0 0.0
    %316 = vmatprep.subr.mxu0 0.0
    %317 = vmatpush1.xpose.msra.mxu0 0.0
    %318 = vmatprep.mubr.f32.mxu0 0.0
    %319 = vmatmul.mubr.f32.gmra.mrb[0].mxu0 %v159
    %v320 = vpop.f32.mrb[0].mxu0
    %v321 = vadd.f32 %v80, %v320
    %v322 = vpop.f32.mrb[0].mxu0
    %323 = vmatprep.mubr.f32.mxu0 0.0
    %324 = vmatmul.mubr.f32.gmra.mrb[0].mxu0 %v162
    %v325 = vpop.f32.mrb[0].mxu0
    %v326 = vadd.f32 %v85, %v325
    %v327 = vpop.f32.mrb[0].mxu0
    %328 = vmatprep.mubr.f32.mxu0 0.0
    %329 = vmatmul.mubr.f32.gmra.mrb[0].mxu0 %v165
    %v330 = vpop.f32.mrb[0].mxu0
    %v331 = vadd.f32 %v90, %v330
    %v332 = vpop.f32.mrb[0].mxu0
    %333 = vmatprep.mubr.f32.mxu0 0.0
    %334 = vmatmul.mubr.f32.gmra.mrb[0].mxu0 %v168
    %v335 = vpop.f32.mrb[0].mxu0
    %v336 = vadd.f32 %v95, %v335
    %v337 = vpop.f32.mrb[0].mxu0
    %338 = vmatprep.mubr.f32.mxu0 0.0
    %339 = vmatmul.mubr.f32.gmra.mrb[0].mxu0 %v171
    %v340 = vpop.f32.mrb[0].mxu0
    %v341 = vadd.f32 %v100, %v340
    %v342 = vpop.f32.mrb[0].mxu0
    %343 = vmatprep.mubr.f32.mxu0 0.0
    %344 = vmatmul.mubr.f32.gmra.mrb[0].mxu0 %v174
    %v345 = vpop.f32.mrb[0].mxu0
    %v346 = vadd.f32 %v105, %v345
    %v347 = vpop.f32.mrb[0].mxu0
    %348 = vmatprep.mubr.f32.mxu0 0.0
    %349 = vmatmul.mubr.f32.gmra.mrb[0].mxu0 %v177
    %v350 = vpop.f32.mrb[0].mxu0
    %v351 = vadd.f32 %v110, %v350
    %v352 = vpop.f32.mrb[0].mxu0
    %353 = vmatprep.mubr.f32.mxu0 0.0
    %354 = vmatmul.mubr.f32.gmra.mrb[0].mxu0 %v180
    %v355 = vpop.f32.mrb[0].mxu0
    %v356 = vadd.f32 %v115, %v355
    %v357 = vpop.f32.mrb[0].mxu0
    %358 = vmatprep.mubr.f32.mxu0 0.0
    %359 = vmatmul.mubr.f32.gmra.mrb[0].mxu0 %v183
    %v360 = vpop.f32.mrb[0].mxu0
    %v361 = vadd.f32 %v120, %v360
    %v362 = vpop.f32.mrb[0].mxu0
    %363 = vmatprep.mubr.f32.mxu0 0.0
    %364 = vmatmul.mubr.f32.gmra.mrb[0].mxu0 %v186
    %v365 = vpop.f32.mrb[0].mxu0
    %v366 = vadd.f32 %v125, %v365
    %v367 = vpop.f32.mrb[0].mxu0
    %368 = vmatprep.mubr.f32.mxu0 0.0
    %369 = vmatmul.mubr.f32.gmra.mrb[0].mxu0 %v189
    %v370 = vpop.f32.mrb[0].mxu0
    %v371 = vadd.f32 %v130, %v370
    %v372 = vpop.f32.mrb[0].mxu0
    %373 = vmatprep.mubr.f32.mxu0 0.0
    %374 = vmatmul.mubr.f32.gmra.mrb[0].mxu0 %v192
    %v375 = vpop.f32.mrb[0].mxu0
    %v376 = vadd.f32 %v135, %v375
    %v377 = vpop.f32.mrb[0].mxu0
    %378 = vmatprep.mubr.f32.mxu0 0.0
    %379 = vmatmul.mubr.f32.gmra.mrb[0].mxu0 %v195
    %v380 = vpop.f32.mrb[0].mxu0
    %v381 = vadd.f32 %v140, %v380
    %v382 = vpop.f32.mrb[0].mxu0
    %383 = vmatprep.mubr.f32.mxu0 0.0
    %384 = vmatmul.mubr.f32.gmra.mrb[0].mxu0 %v198
    %v385 = vpop.f32.mrb[0].mxu0
    %v386 = vadd.f32 %v145, %v385
    %v387 = vpop.f32.mrb[0].mxu0
    %388 = vmatprep.mubr.f32.mxu0 0.0
    %389 = vmatmul.mubr.f32.gmra.mrb[0].mxu0 %v201
    %v390 = vpop.f32.mrb[0].mxu0
    %v391 = vadd.f32 %v150, %v390
    %v392 = vpop.f32.mrb[0].mxu0
    %393 = vmatprep.mubr.f32.mxu0 0.0
    %394 = vmatmul.mubr.f32.gmra.mrb[0].mxu0 %v204
    %v395 = vpop.f32.mrb[0].mxu0
    %v396 = vadd.f32 %v155, %v395
    %v397 = vpop.f32.mrb[0].mxu0
    %398 = vdwg.mxu0
    %v399 = vmax.f32 %v321, 0.0
    %v400 = vmax.f32 %v326, 0.0
    %v401 = vmax.f32 %v331, 0.0
    %v402 = vmax.f32 %v336, 0.0
    %v403 = vmax.f32 %v341, 0.0
    %v404 = vmax.f32 %v346, 0.0
    %v405 = vmax.f32 %v351, 0.0
    %v406 = vmax.f32 %v356, 0.0
    %v407 = vld [vmem:[%s3] sm:$0xff]
    %v408 = vld [vmem:[%s3 + $0x8] sm:$0xff]
    %v409 = vld [vmem:[%s3 + $0x10] sm:$0xff]
    %v410 = vld [vmem:[%s3 + $0x18] sm:$0xff]
    %v411 = vld [vmem:[%s3 + $0x20] sm:$0xff]
    %v412 = vld [vmem:[%s3 + $0x28] sm:$0xff]
    %v413 = vld [vmem:[%s3 + $0x30] sm:$0xff]
    %v414 = vld [vmem:[%s3 + $0x38] sm:$0xff]
    %vm415 = vcmask 523264
    %v417 = vsel %vm415, %v407, 0
    %v420 = vsel %vm415, %v408, 0
    %v423 = vsel %vm415, %v409, 0
    %v426 = vsel %vm415, %v410, 0
    %v429 = vsel %vm415, %v411, 0
    %v432 = vsel %vm415, %v412, 0
    %v435 = vsel %vm415, %v413, 0
    %v438 = vsel %vm415, %v414, 0
    %440 = vmatprep.subr.mxu0 0.0
    %441 = vmatpush1.msra.mxu0 %v399
    %442 = vmatprep.subr.mxu0 0.0
    %443 = vmatpush1.msra.mxu0 %v400
    %444 = vmatprep.subr.mxu0 0.0
    %445 = vmatpush1.msra.mxu0 %v401
    %446 = vmatprep.subr.mxu0 0.0
    %447 = vmatpush1.msra.mxu0 %v402
    %448 = vmatprep.subr.mxu0 0.0
    %449 = vmatpush1.msra.mxu0 %v403
    %450 = vmatprep.subr.mxu0 0.0
    %451 = vmatpush1.msra.mxu0 %v404
    %452 = vmatprep.subr.mxu0 0.0
    %453 = vmatpush1.msra.mxu0 %v405
    %454 = vmatprep.subr.mxu0 0.0
    %455 = vmatpush1.msra.mxu0 %v406
    %456 = vmatprep.subr.mxu0 0.0
    %457 = vmatpush1.msra.mxu0 0.0
    %458 = vmatprep.subr.mxu0 0.0
    %459 = vmatpush1.msra.mxu0 0.0
    %460 = vmatprep.subr.mxu0 0.0
    %461 = vmatpush1.msra.mxu0 0.0
    %462 = vmatprep.subr.mxu0 0.0
    %463 = vmatpush1.msra.mxu0 0.0
    %464 = vmatprep.subr.mxu0 0.0
    %465 = vmatpush1.msra.mxu0 0.0
    %466 = vmatprep.subr.mxu0 0.0
    %467 = vmatpush1.msra.mxu0 0.0
    %468 = vmatprep.subr.mxu0 0.0
    %469 = vmatpush1.msra.mxu0 0.0
    %470 = vmatprep.subr.mxu0 0.0
    %471 = vmatpush1.msra.mxu0 0.0
    %472 = vmatprep.subr.mxu0 0.0
    %473 = vmatpush1.msra.mxu0 0.0
    %474 = vmatprep.subr.mxu0 0.0
    %475 = vmatpush1.msra.mxu0 0.0
    %476 = vmatprep.subr.mxu0 0.0
    %477 = vmatpush1.msra.mxu0 0.0
    %478 = vmatprep.subr.mxu0 0.0
    %479 = vmatpush1.msra.mxu0 0.0
    %480 = vmatprep.subr.mxu0 0.0
    %481 = vmatpush1.msra.mxu0 0.0
    %482 = vmatprep.subr.mxu0 0.0
    %483 = vmatpush1.msra.mxu0 0.0
    %484 = vmatprep.subr.mxu0 0.0
    %485 = vmatpush1.msra.mxu0 0.0
    %486 = vmatprep.subr.mxu0 0.0
    %487 = vmatpush1.msra.mxu0 0.0
    %488 = vmatprep.subr.mxu0 0.0
    %489 = vmatpush1.msra.mxu0 0.0
    %490 = vmatprep.subr.mxu0 0.0
    %491 = vmatpush1.msra.mxu0 0.0
    %492 = vmatprep.subr.mxu0 0.0
    %493 = vmatpush1.msra.mxu0 0.0
    %494 = vmatprep.subr.mxu0 0.0
    %495 = vmatpush1.msra.mxu0 0.0
    %496 = vmatprep.subr.mxu0 0.0
    %497 = vmatpush1.msra.mxu0 0.0
    %498 = vmatprep.subr.mxu0 0.0
    %499 = vmatpush1.msra.mxu0 0.0
    %500 = vmatprep.subr.mxu0 0.0
    %501 = vmatpush1.msra.mxu0 0.0
    %502 = vmatprep.subr.mxu0 0.0
    %503 = vmatpush1.msra.mxu0 0.0
    %504 = vmatprep.mubr.f32.mxu0 0.0
    %505 = vmatmul.mubr.f32.gmra.mrb[0].mxu0 %v417
    %v506 = vpop.f32.mrb[0].mxu0
    %v507 = vadd.f32 %v361, %v506
    %v508 = vpop.f32.mrb[0].mxu0
    %509 = vmatprep.mubr.f32.mxu0 0.0
    %510 = vmatmul.mubr.f32.gmra.mrb[0].mxu0 %v420
    %v511 = vpop.f32.mrb[0].mxu0
    %v512 = vadd.f32 %v366, %v511
    %v513 = vpop.f32.mrb[0].mxu0
    %514 = vmatprep.mubr.f32.mxu0 0.0
    %515 = vmatmul.mubr.f32.gmra.mrb[0].mxu0 %v423
    %v516 = vpop.f32.mrb[0].mxu0
    %v517 = vadd.f32 %v371, %v516
    %v518 = vpop.f32.mrb[0].mxu0
    %519 = vmatprep.mubr.f32.mxu0 0.0
    %520 = vmatmul.mubr.f32.gmra.mrb[0].mxu0 %v426
    %v521 = vpop.f32.mrb[0].mxu0
    %v522 = vadd.f32 %v376, %v521
    %v523 = vpop.f32.mrb[0].mxu0
    %524 = vmatprep.mubr.f32.mxu0 0.0
    %525 = vmatmul.mubr.f32.gmra.mrb[0].mxu0 %v429
    %v526 = vpop.f32.mrb[0].mxu0
    %v527 = vadd.f32 %v381, %v526
    %v528 = vpop.f32.mrb[0].mxu0
    %529 = vmatprep.mubr.f32.mxu0 0.0
    %530 = vmatmul.mubr.f32.gmra.mrb[0].mxu0 %v432
    %v531 = vpop.f32.mrb[0].mxu0
    %v532 = vadd.f32 %v386, %v531
    %v533 = vpop.f32.mrb[0].mxu0
    %534 = vmatprep.mubr.f32.mxu0 0.0
    %535 = vmatmul.mubr.f32.gmra.mrb[0].mxu0 %v435
    %v536 = vpop.f32.mrb[0].mxu0
    %v537 = vadd.f32 %v391, %v536
    %v538 = vpop.f32.mrb[0].mxu0
    %539 = vmatprep.mubr.f32.mxu0 0.0
    %540 = vmatmul.mubr.f32.gmra.mrb[0].mxu0 %v438
    %v541 = vpop.f32.mrb[0].mxu0
    %v542 = vadd.f32 %v396, %v541
    %v543 = vpop.f32.mrb[0].mxu0
    %544 = vdwg.mxu0
    %v545 = vld [vmem:[%s4] sm:$0xff]
    %v546 = vld [vmem:[%s4 + $0x8] sm:$0xff]
    %v547 = vld [vmem:[%s4 + $0x10] sm:$0xff]
    %v548 = vld [vmem:[%s4 + $0x18] sm:$0xff]
    %v549 = vld [vmem:[%s4 + $0x20] sm:$0xff]
    %v550 = vld [vmem:[%s4 + $0x28] sm:$0xff]
    %v551 = vld [vmem:[%s4 + $0x30] sm:$0xff]
    %v552 = vld [vmem:[%s4 + $0x38] sm:$0xff]
    %554 = vset.pattern.permute.xlu0 0
    %555 = vperm.xlu0 %554, %v545
    %v556 = vpop.permute.xlu0 %555
    %559 = vset.pattern.permute.xlu0 0
    %560 = vperm.xlu0 %559, %v546
    %v561 = vpop.permute.xlu0 %560
    %564 = vset.pattern.permute.xlu0 0
    %565 = vperm.xlu0 %564, %v547
    %v566 = vpop.permute.xlu0 %565
    %569 = vset.pattern.permute.xlu0 0
    %570 = vperm.xlu0 %569, %v548
    %v571 = vpop.permute.xlu0 %570
    %574 = vset.pattern.permute.xlu0 0
    %575 = vperm.xlu0 %574, %v549
    %v576 = vpop.permute.xlu0 %575
    %579 = vset.pattern.permute.xlu0 0
    %580 = vperm.xlu0 %579, %v550
    %v581 = vpop.permute.xlu0 %580
    %584 = vset.pattern.permute.xlu0 0
    %585 = vperm.xlu0 %584, %v551
    %v586 = vpop.permute.xlu0 %585
    %589 = vset.pattern.permute.xlu0 0
    %590 = vperm.xlu0 %589, %v552
    %v591 = vpop.permute.xlu0 %590
    %v593 = vadd.f32 %v507, %v556
    %v594 = vadd.f32 %v512, %v561
    %v595 = vadd.f32 %v517, %v566
    %v596 = vadd.f32 %v522, %v571
    %v597 = vadd.f32 %v527, %v576
    %v598 = vadd.f32 %v532, %v581
    %v599 = vadd.f32 %v537, %v586
    %v600 = vadd.f32 %v542, %v591
    %v601 = vmax.f32 %v593, 0.0
    %v602 = vmax.f32 %v594, 0.0
    %v603 = vmax.f32 %v595, 0.0
    %v604 = vmax.f32 %v596, 0.0
    %v605 = vmax.f32 %v597, 0.0
    %v606 = vmax.f32 %v598, 0.0
    %v607 = vmax.f32 %v599, 0.0
    %v608 = vmax.f32 %v600, 0.0
    %v609 = vld [vmem:[%s5] sm:$0xff]
    %v610 = vld [vmem:[%s5 + $0x8] sm:$0xff]
    %v611 = vld [vmem:[%s5 + $0x10] sm:$0xff]
    %v612 = vld [vmem:[%s5 + $0x18] sm:$0xff]
    %v613 = vld [vmem:[%s5 + $0x20] sm:$0xff]
    %v614 = vld [vmem:[%s5 + $0x28] sm:$0xff]
    %v615 = vld [vmem:[%s5 + $0x30] sm:$0xff]
    %v616 = vld [vmem:[%s5 + $0x38] sm:$0xff]
    %618 = vset.pattern.permute.xlu0 0
    %619 = vperm.xlu0 %618, %v609
    %v620 = vpop.permute.xlu0 %619
    %623 = vset.pattern.permute.xlu0 0
    %624 = vperm.xlu0 %623, %v610
    %v625 = vpop.permute.xlu0 %624
    %628 = vset.pattern.permute.xlu0 0
    %629 = vperm.xlu0 %628, %v611
    %v630 = vpop.permute.xlu0 %629
    %633 = vset.pattern.permute.xlu0 0
    %634 = vperm.xlu0 %633, %v612
    %v635 = vpop.permute.xlu0 %634
    %638 = vset.pattern.permute.xlu0 0
    %639 = vperm.xlu0 %638, %v613
    %v640 = vpop.permute.xlu0 %639
    %643 = vset.pattern.permute.xlu0 0
    %644 = vperm.xlu0 %643, %v614
    %v645 = vpop.permute.xlu0 %644
    %648 = vset.pattern.permute.xlu0 0
    %649 = vperm.xlu0 %648, %v615
    %v650 = vpop.permute.xlu0 %649
    %653 = vset.pattern.permute.xlu0 0
    %654 = vperm.xlu0 %653, %v616
    %v655 = vpop.permute.xlu0 %654
    %v657 = vmul.f32 %v601, %v620
    %v658 = vmul.f32 %v602, %v625
    %v659 = vmul.f32 %v603, %v630
    %v660 = vmul.f32 %v604, %v635
    %v661 = vmul.f32 %v605, %v640
    %v662 = vmul.f32 %v606, %v645
    %v663 = vmul.f32 %v607, %v650
    %v664 = vmul.f32 %v608, %v655
    %v665 = vadd.f32 %v657, %v658
    %v666 = vadd.f32 %v665, %v659
    %v667 = vadd.f32 %v666, %v660
    %v668 = vadd.f32 %v667, %v661
    %v669 = vadd.f32 %v668, %v662
    %v670 = vadd.f32 %v669, %v663
    %v671 = vadd.f32 %v670, %v664
    %v672 = vrot.slane %v671, 4
    %v673 = vadd.f32 %v671, %v672
    %v674 = vrot.slane %v673, 2
    %v675 = vadd.f32 %v673, %v674
    %v676 = vrot.slane %v675, 1
    %v677 = vadd.f32 %v675, %v676
    %v678 = vld [vmem:[#allocation2] sm:$0x1]
    %680 = vset.pattern.permute.xlu0 0
    %681 = vperm.xlu0 %680, %v678
    %v682 = vpop.permute.xlu0 %681
    %v684 = vlaneseq
    %v685 = vshrl.u32 %v684, 7
    %v686 = vsub.s32 0, %v685
    %v687 = vrot.slane %v682, %v686
    %v688 = vadd.f32 %v677, %v687
    %689 = vst [vmem:[#allocation3] sm:$0x1] %v688
    // Predicated region
    $region30: #{tpu_custom_call.1} parent=1 // pred_check
      _
    $region31: #{tpu_custom_call.1} parent=1 // pred_check_branch
      %691 = sbr.rel (0) target = $region33
    $region32: #{tpu_custom_call.1} parent=1 // pred_region
      %s693 = ssub.s32 16, 16
      %694 = vsyncadd [#allocation4], %s693
      %s696 = sshll.u32 [#allocation3], 4
      %s697 = int_to_ptr.vmem [resolvable:$true] %s696
      %699 = dma.vmem_to_hbm [thread:$0]  %s697, 16, %s7, [#allocation4]
    $region33: #{tpu_custom_call.1} parent=1 // pred_fallthru
      _
    // Predicated region
    $region34: #{tpu_custom_call.1} parent=1 // pred_check
      _
    $region35: #{tpu_custom_call.1} parent=1 // pred_check_branch
      %701 = sbr.rel (0) target = $region37
    $region36: #{tpu_custom_call.1} parent=1 // pred_region
      %702 = dma.done [#allocation4], 16
    $region37: #{tpu_custom_call.1} parent=1 // pred_fallthru
      _
    %703 = vsyncpa [#allocation4], 1

</llo_original>
